<compile_context>
chip_gen: v7x
topology: tpu7x:2x2x1
jax: 0.10.0
libtpu: 0.0.40
codegen_flags: <defaults>
</compile_context>

<pallas_src>
import functools

import jax
import jax.numpy as jnp
from jax.experimental import pallas as pl
from jax.experimental.pallas import tpu as pltpu

LANE = 128
PAIRS_PER_ROW = LANE // 2   # 64 samples per interleaved 128-lane row


# ----------------------------- Pallas kernel ------------------------------

def _fnn_kernel(w1_ref, w2_ref, x_ref, o_ref):
    # x_ref / o_ref : (bs, 128) f32, interleaved pairs along lanes:
    #   lane 2m   -> feature / class 0 of sample (row*64 + m)
    #   lane 2m+1 -> feature / class 1 of the same sample
    # w1_ref : SMEM f32[2*H]  (l1.weight row-major: w1[j, k] at 2*j + k)
    # w2_ref : SMEM f32[2*H]  (l2.weight row-major: w2[c, j] at H*c + j)
    x = x_ref[...]
    n_hidden = w1_ref.shape[0] // 2

    lane = jax.lax.broadcasted_iota(jnp.int32, x.shape, 1)
    is_even = (lane & 1) == 0

    # Exchange even/odd lane partners so both features of a sample are
    # available at both of its lanes (rolls run on the XLU slot; wrap lanes
    # are never selected because of the parity mask).
    x_prev = pltpu.roll(x, 1, 1)      # value from lane-1
    x_next = pltpu.roll(x, 127, 1)    # value from lane+1  (shift -1 mod 128)
    x0 = jnp.where(is_even, x, x_prev)    # feature 0, on both lanes of pair
    x1 = jnp.where(is_even, x_next, x)    # feature 1, on both lanes of pair

    acc = jnp.zeros_like(x)
    for j in range(n_hidden):
        # sigmoid(z) = 0.5*tanh(z/2) + 0.5; fold the /2 into the scalar weights.
        a = 0.5 * w1_ref[2 * j]
        b = 0.5 * w1_ref[2 * j + 1]
        t = jnp.tanh(a * x0 + b * x1)                     # EUP
        h = 0.5 * t + 0.5                                 # sigmoid activation
        # Even lanes accumulate class 0, odd lanes class 1.
        w2_lane = jnp.where(is_even, w2_ref[j], w2_ref[n_hidden + j])
        acc = acc + w2_lane * h
    o_ref[...] = acc


# ------------------------------- wrapper -----------------------------------

def _round_up(v, m):
    return ((v + m - 1) // m) * m


@functools.partial(jax.jit, static_argnames=("block_rows",))
def fnn_forward(x, w1, w2, *, block_rows=1024):
    """sigmoid(x @ w1.T) @ w2.T  (torch Linear layout, bias=False).

    x : [N, 2] float32, w1: [H, 2] (l1.weight), w2: [2, H] (l2.weight).
    """
    n, d = x.shape
    h_dim = w1.shape[0]
    c = w2.shape[0]

    if d != 2 or c != 2:
        # TODO(synk): the lane-pair layout assumes input_dim == num_classes == 2
        # (the module defaults); other widths fall back to plain XLA.
        hmid = jax.nn.sigmoid(jnp.dot(x, w1.T, precision="highest"))
        return jnp.dot(hmid, w2.T, precision="highest")

    x = x.astype(jnp.float32)
    w1 = w1.astype(jnp.float32)
    w2 = w2.astype(jnp.float32)

    # Fast path needs N % 64 == 0 so the interleaved [G,128] view is a free
    # contiguous reshape; otherwise pad up to the next multiple of 64 rows.
    n_eff = _round_up(n, PAIRS_PER_ROW)
    if n_eff != n:
        x = jnp.pad(x, ((0, n_eff - n), (0, 0)))

    g = (2 * n_eff) // LANE           # interleaved rows
    x2d = x.reshape(g, LANE)          # free: contiguous row-major view

    # Batch tile: big enough to amortize ~0.35us/step, >=2 steps when possible
    # (keeps both v7x TensorCores busy), multiple of 8 sublanes or full extent.
    if g <= 8:
        bs = g
    else:
        bs = max(8, min(block_rows, _round_up(pl.cdiv(g, 2), 8)))
    grid = (pl.cdiv(g, bs),)

    lanes = g * LANE
    cost = pl.CostEstimate(
        flops=lanes * (7 * h_dim + 5),
        transcendentals=lanes * h_dim,
        bytes_accessed=2 * lanes * 4 + (w1.size + w2.size) * 4,
    )

    out2d = pl.pallas_call(
        _fnn_kernel,
        out_shape=jax.ShapeDtypeStruct((g, LANE), jnp.float32),
        grid=grid,
        in_specs=[
            pl.BlockSpec(memory_space=pltpu.MemorySpace.SMEM),  # w1 (flat, 6 scalars)
            pl.BlockSpec(memory_space=pltpu.MemorySpace.SMEM),  # w2 (flat, 6 scalars)
            pl.BlockSpec((bs, LANE), lambda i: (i, 0)),         # x, interleaved rows
        ],
        out_specs=pl.BlockSpec((bs, LANE), lambda i: (i, 0)),   # out, interleaved rows
        compiler_params=pltpu.CompilerParams(
            dimension_semantics=("parallel",)),
        cost_estimate=cost,
    )(w1.reshape(-1), w2.reshape(-1), x2d)

    out = out2d.reshape(n_eff, 2)     # free reshape back to [n_eff, 2]
    return out if n_eff == n else out[:n]


# ------------------------- deterministic parameters ------------------------

def xavier_uniform(key, shape, gain):
    # matches torch.nn.init.xavier_uniform for a Linear weight [out, in]
    fan_out, fan_in = shape
    a = gain * jnp.sqrt(6.0 / (fan_in + fan_out))
    return jax.random.uniform(key, shape, jnp.float32, -a, a)


def _ref_forward(x, w1, w2):
    h = jax.nn.sigmoid(jnp.dot(x, w1.T, precision="highest"))
    return jnp.dot(h, w2.T, precision="highest")


if __name__ == "__main__":
    input_dim, n_hidden, num_classes = 2, 3, 2

    key = jax.random.PRNGKey(0)
    kx, k1, k2, kx2 = jax.random.split(key, 4)

    gain = jnp.sqrt(0.8)
    w1 = xavier_uniform(k1, (n_hidden, input_dim), gain)     # l1.weight (bias=False)
    w2 = xavier_uniform(k2, (num_classes, n_hidden), gain)   # l2.weight (bias=False)

    # Small, 64-aligned batch -> pure fast path (no pad, no slice).
    x = jax.random.normal(kx, (128, input_dim), jnp.float32)
    out = fnn_forward(x, w1, w2)
    jax.block_until_ready(out)
    ref = _ref_forward(x, w1, w2)
    assert out.shape == (128, num_classes)
    assert jnp.allclose(out, ref, atol=1e-5, rtol=1e-5)

    # Non-64-aligned batch -> exercises the pad fallback, a 2-step grid and a
    # partial (masked) edge block.
    x_big = jax.random.normal(kx2, (2052, input_dim), jnp.float32)
    out_big = fnn_forward(x_big, w1, w2)
    jax.block_until_ready(out_big)
    ref_big = _ref_forward(x_big, w1, w2)
    assert out_big.shape == (2052, num_classes)
    assert jnp.allclose(out_big, ref_big, atol=1e-5, rtol=1e-5)

    # TODO(synk): get_loss / get_grad / get_grad_norm / get_pred_acc
    # (CrossEntropy, autograd, argmax accuracy) are training-side utilities,
    # not part of forward().
    print("KERNEL_OK")
</pallas_src>

<mosaic_0001>
module attributes {stable_mosaic.version = 11 : i64} {
  func.func @_fnn_kernel(%arg0: i32, %arg1: memref<6xf32, #tpu.memory_space<smem>>, %arg2: memref<6xf32, #tpu.memory_space<smem>>, %arg3: memref<2x128xf32, #tpu.memory_space<vmem>>, %arg4: memref<2x128xf32, #tpu.memory_space<vmem>>) attributes {dimension_semantics = [#tpu.dimension_semantics<parallel>], iteration_bounds = array<i64: 1>, scalar_prefetch = 0 : i64, scratch_operands = 0 : i64, tpu.core_type = #tpu.core_type<tc>, window_params = [{transform_indices = @transform_0, window_bounds = array<i64: 6>}, {transform_indices = @transform_1, window_bounds = array<i64: 6>}, {transform_indices = @transform_2, window_bounds = array<i64: 2, 128>}, {transform_indices = @transform_3, window_bounds = array<i64: 2, 128>}]} {
    %c0 = arith.constant 0 : index
    %c0_0 = arith.constant 0 : index
    %0 = vector.load %arg3[%c0, %c0_0] : memref<2x128xf32, #tpu.memory_space<vmem>>, vector<2x128xf32>
    %1 = tpu.iota {dimensions = array<i32: 1>} : vector<2x128xi32>
    %c1_i32 = arith.constant 1 : i32
    %2 = vector.broadcast %c1_i32 : i32 to vector<2x128xi32>
    %3 = arith.andi %1, %2 : vector<2x128xi32>
    %c0_i32 = arith.constant 0 : i32
    %4 = vector.broadcast %c0_i32 : i32 to vector<2x128xi32>
    %5 = arith.cmpi eq, %3, %4 : vector<2x128xi32>
    %c1_i32_1 = arith.constant 1 : i32
    %6 = tpu.dynamic_rotate %0 by %c1_i32_1 dim 1 : vector<2x128xf32>, i32 -> vector<2x128xf32>
    %c127_i32 = arith.constant 127 : i32
    %7 = tpu.dynamic_rotate %0 by %c127_i32 dim 1 : vector<2x128xf32>, i32 -> vector<2x128xf32>
    %8 = arith.select %5, %0, %6 : vector<2x128xi1>, vector<2x128xf32>
    %9 = arith.select %5, %7, %0 : vector<2x128xi1>, vector<2x128xf32>
    %cst = arith.constant 0.000000e+00 : f32
    %10 = vector.broadcast %cst : f32 to vector<2x128xf32>
    %c0_2 = arith.constant 0 : index
    %11 = memref.load %arg1[%c0_2] : memref<6xf32, #tpu.memory_space<smem>>
    %cst_3 = arith.constant 5.000000e-01 : f32
    %12 = arith.mulf %cst_3, %11 : f32
    %c1 = arith.constant 1 : index
    %13 = memref.load %arg1[%c1] : memref<6xf32, #tpu.memory_space<smem>>
    %cst_4 = arith.constant 5.000000e-01 : f32
    %14 = arith.mulf %cst_4, %13 : f32
    %15 = vector.broadcast %12 : f32 to vector<2x128xf32>
    %16 = arith.mulf %15, %8 : vector<2x128xf32>
    %17 = vector.broadcast %14 : f32 to vector<2x128xf32>
    %18 = arith.mulf %17, %9 : vector<2x128xf32>
    %19 = arith.addf %16, %18 : vector<2x128xf32>
    %20 = math.tanh %19 : vector<2x128xf32>
    %cst_5 = arith.constant 5.000000e-01 : f32
    %21 = vector.broadcast %cst_5 : f32 to vector<2x128xf32>
    %22 = arith.mulf %21, %20 : vector<2x128xf32>
    %cst_6 = arith.constant 5.000000e-01 : f32
    %23 = vector.broadcast %cst_6 : f32 to vector<2x128xf32>
    %24 = arith.addf %22, %23 : vector<2x128xf32>
    %c0_7 = arith.constant 0 : index
    %25 = memref.load %arg2[%c0_7] : memref<6xf32, #tpu.memory_space<smem>>
    %c3 = arith.constant 3 : index
    %26 = memref.load %arg2[%c3] : memref<6xf32, #tpu.memory_space<smem>>
    %27 = vector.broadcast %25 : f32 to vector<2x128xf32>
    %28 = vector.broadcast %26 : f32 to vector<2x128xf32>
    %29 = arith.select %5, %27, %28 : vector<2x128xi1>, vector<2x128xf32>
    %30 = arith.mulf %29, %24 : vector<2x128xf32>
    %31 = arith.addf %10, %30 : vector<2x128xf32>
    %c2 = arith.constant 2 : index
    %32 = memref.load %arg1[%c2] : memref<6xf32, #tpu.memory_space<smem>>
    %cst_8 = arith.constant 5.000000e-01 : f32
    %33 = arith.mulf %cst_8, %32 : f32
    %c3_9 = arith.constant 3 : index
    %34 = memref.load %arg1[%c3_9] : memref<6xf32, #tpu.memory_space<smem>>
    %cst_10 = arith.constant 5.000000e-01 : f32
    %35 = arith.mulf %cst_10, %34 : f32
    %36 = vector.broadcast %33 : f32 to vector<2x128xf32>
    %37 = arith.mulf %36, %8 : vector<2x128xf32>
    %38 = vector.broadcast %35 : f32 to vector<2x128xf32>
    %39 = arith.mulf %38, %9 : vector<2x128xf32>
    %40 = arith.addf %37, %39 : vector<2x128xf32>
    %41 = math.tanh %40 : vector<2x128xf32>
    %cst_11 = arith.constant 5.000000e-01 : f32
    %42 = vector.broadcast %cst_11 : f32 to vector<2x128xf32>
    %43 = arith.mulf %42, %41 : vector<2x128xf32>
    %cst_12 = arith.constant 5.000000e-01 : f32
    %44 = vector.broadcast %cst_12 : f32 to vector<2x128xf32>
    %45 = arith.addf %43, %44 : vector<2x128xf32>
    %c1_13 = arith.constant 1 : index
    %46 = memref.load %arg2[%c1_13] : memref<6xf32, #tpu.memory_space<smem>>
    %c4 = arith.constant 4 : index
    %47 = memref.load %arg2[%c4] : memref<6xf32, #tpu.memory_space<smem>>
    %48 = vector.broadcast %46 : f32 to vector<2x128xf32>
    %49 = vector.broadcast %47 : f32 to vector<2x128xf32>
    %50 = arith.select %5, %48, %49 : vector<2x128xi1>, vector<2x128xf32>
    %51 = arith.mulf %50, %45 : vector<2x128xf32>
    %52 = arith.addf %31, %51 : vector<2x128xf32>
    %c4_14 = arith.constant 4 : index
    %53 = memref.load %arg1[%c4_14] : memref<6xf32, #tpu.memory_space<smem>>
    %cst_15 = arith.constant 5.000000e-01 : f32
    %54 = arith.mulf %cst_15, %53 : f32
    %c5 = arith.constant 5 : index
    %55 = memref.load %arg1[%c5] : memref<6xf32, #tpu.memory_space<smem>>
    %cst_16 = arith.constant 5.000000e-01 : f32
    %56 = arith.mulf %cst_16, %55 : f32
    %57 = vector.broadcast %54 : f32 to vector<2x128xf32>
    %58 = arith.mulf %57, %8 : vector<2x128xf32>
    %59 = vector.broadcast %56 : f32 to vector<2x128xf32>
    %60 = arith.mulf %59, %9 : vector<2x128xf32>
    %61 = arith.addf %58, %60 : vector<2x128xf32>
    %62 = math.tanh %61 : vector<2x128xf32>
    %cst_17 = arith.constant 5.000000e-01 : f32
    %63 = vector.broadcast %cst_17 : f32 to vector<2x128xf32>
    %64 = arith.mulf %63, %62 : vector<2x128xf32>
    %cst_18 = arith.constant 5.000000e-01 : f32
    %65 = vector.broadcast %cst_18 : f32 to vector<2x128xf32>
    %66 = arith.addf %64, %65 : vector<2x128xf32>
    %c2_19 = arith.constant 2 : index
    %67 = memref.load %arg2[%c2_19] : memref<6xf32, #tpu.memory_space<smem>>
    %c5_20 = arith.constant 5 : index
    %68 = memref.load %arg2[%c5_20] : memref<6xf32, #tpu.memory_space<smem>>
    %69 = vector.broadcast %67 : f32 to vector<2x128xf32>
    %70 = vector.broadcast %68 : f32 to vector<2x128xf32>
    %71 = arith.select %5, %69, %70 : vector<2x128xi1>, vector<2x128xf32>
    %72 = arith.mulf %71, %66 : vector<2x128xf32>
    %73 = arith.addf %52, %72 : vector<2x128xf32>
    %c0_21 = arith.constant 0 : index
    %c0_22 = arith.constant 0 : index
    %74 = vector.load %arg4[%c0_21, %c0_22] : memref<2x128xf32, #tpu.memory_space<vmem>>, vector<2x128xf32>
    tpu.vector_store %arg4[%c0_21, %c0_22], %73 {strides = array<i32>} : memref<2x128xf32, #tpu.memory_space<vmem>>, vector<2x128xf32>,
    return
  }
  func.func @transform_0(%arg0: i32) -> i32 {
    %c0_i32 = arith.constant 0 : i32
    %c0_i32_0 = arith.constant 0 : i32
    return %c0_i32 : i32
  }
  func.func @transform_1(%arg0: i32) -> i32 {
    %c0_i32 = arith.constant 0 : i32
    %c0_i32_0 = arith.constant 0 : i32
    return %c0_i32 : i32
  }
  func.func @transform_2(%arg0: i32) -> (i32, i32) {
    %c0_i32 = arith.constant 0 : i32
    %c0_i32_0 = arith.constant 0 : i32
    return %arg0, %c0_i32 : i32, i32
  }
  func.func @transform_3(%arg0: i32) -> (i32, i32) {
    %c0_i32 = arith.constant 0 : i32
    %c0_i32_0 = arith.constant 0 : i32
    return %arg0, %c0_i32 : i32, i32
  }
}

</mosaic_0001>

<llo_original>
// kernel: fnn_forward.1
$region0: #{fnn_forward.1}
  #allocation0 [shape = 'u32[]', space=smem, size = 0x4, offset = 0x4, fixed_abs, tag = 'smem constant byte address 0x4 - core index']
  #allocation1 [shape = 'u32[144,128]{1,0:T(1,128)}', space=vmem, size = 0x12000, scoped, tag = 'internal scratch']
  %s0 = inlined_call_operand.vmem [shape: f32[6], index: 0, kind: input, shape index: {}]
  %s1 = inlined_call_operand.vmem [shape: f32[6], index: 1, kind: input, shape index: {}]
  %s2 = inlined_call_operand.vmem [shape: f32[2,128], index: 2, kind: input, shape index: {}]
  %s3 = inlined_call_operand.vmem [shape: f32[2,128], index: 3, kind: output, shape index: {}]
  %s4 = sld [smem:[#allocation0]]
  $region30: #{fnn_forward.1} parent=0
    _
  %s6 = ssub.s32 1, %s4
  %s7 = scalar_select 0, %s6, %s4
  $region1: #{fnn_forward.1} parent=0
    #allocation2 [shape = 'u8[512]{0}', space=smem, size = 0x200, scoped, tag = 'input window, operand 0, single buffered']
    #allocation3 [shape = 's32[1]{0}', space=sflag, size = 0x4, scoped, tag = 'scoped memory for fnn_forward.1']
    #allocation4 [shape = 'u8[512]{0}', space=smem, size = 0x200, scoped, tag = 'input window, operand 1, single buffered']
    #allocation5 [shape = 's32[1]{0}', space=sflag, size = 0x4, scoped, tag = 'scoped memory for fnn_forward.1']
    %8 = vsyncpa [#allocation3], 0
    %9 = vsyncpa [#allocation5], 0
    // Predicated region
    $region2: #{fnn_forward.1} parent=1 // pred_check
      _
    $region3: #{fnn_forward.1} parent=1 // pred_check_branch
      %11 = sbr.rel (0) target = $region5
    $region4: #{fnn_forward.1} parent=1 // pred_region
      %s13 = ssub.s32 16, 16
      %14 = vsyncadd [#allocation3], %s13
      %s16 = sshll.u32 %s0, 4
      %s17 = int_to_ptr.vmem [resolvable:$true] %s16
      %19 = dma.vmem_to_smem %s17, 16, [#allocation2], [#allocation3]
    $region5: #{fnn_forward.1} parent=1 // pred_fallthru
      _
    // Predicated region
    $region6: #{fnn_forward.1} parent=1 // pred_check
      _
    $region7: #{fnn_forward.1} parent=1 // pred_check_branch
      %21 = sbr.rel (0) target = $region9
    $region8: #{fnn_forward.1} parent=1 // pred_region
      %s23 = ssub.s32 16, 16
      %24 = vsyncadd [#allocation5], %s23
      %s26 = sshll.u32 %s1, 4
      %s27 = int_to_ptr.vmem [resolvable:$true] %s26
      %29 = dma.vmem_to_smem %s27, 16, [#allocation4], [#allocation5]
    $region9: #{fnn_forward.1} parent=1 // pred_fallthru
      _
    // Predicated region
    $region10: #{fnn_forward.1} parent=1 // pred_check
      _
    $region11: #{fnn_forward.1} parent=1 // pred_check_branch
      %31 = sbr.rel (0) target = $region13
    $region12: #{fnn_forward.1} parent=1 // pred_region
      _
    $region13: #{fnn_forward.1} parent=1 // pred_fallthru
      _
    // Predicated region
    $region14: #{fnn_forward.1} parent=1 // pred_check
      _
    $region15: #{fnn_forward.1} parent=1 // pred_check_branch
      %33 = sbr.rel (0) target = $region17
    $region16: #{fnn_forward.1} parent=1 // pred_region
      %34 = dma.done [#allocation3], 16
    $region17: #{fnn_forward.1} parent=1 // pred_fallthru
      _
    // Predicated region
    $region18: #{fnn_forward.1} parent=1 // pred_check
      _
    $region19: #{fnn_forward.1} parent=1 // pred_check_branch
      %36 = sbr.rel (0) target = $region21
    $region20: #{fnn_forward.1} parent=1 // pred_region
      %37 = dma.done [#allocation5], 16
    $region21: #{fnn_forward.1} parent=1 // pred_fallthru
      _
    %38 = sfence
    %v39 = vld [vmem:[%s2] sm:$0x3]
    %v40 = vlaneseq
    %v41 = vand.u32 %v40, 127
    %v42 = vand.u32 %v41, 1
    %vm43 = vcmp.eq.s32.totalorder %v42, 0
    %44 = vrot.lane.b32.xlu0 %v39, 1
    %v45 = vpop.permute.xlu0 %44
    %46 = vrot.lane.b32.xlu0 %v39, 127
    %v47 = vpop.permute.xlu0 %46
    %v48 = vsel %vm43, %v39, %v45
    %v49 = vsel %vm43, %v47, %v39
    %s50 = sld [smem:[#allocation2]]
    %s51 = smul.f32 %s50, 0.5
    %s52 = sld [smem:[#allocation2 + $0x1]]
    %s53 = smul.f32 %s52, 0.5
    %v54 = vstv %s51
    %v55 = vmul.f32 %v54, %v48
    %v56 = vstv %s53
    %v57 = vmul.f32 %v56, %v49
    %v58 = vadd.f32 %v55, %v57
    %v59 = vtanh.pop %v58
    %v60 = vmul.f32 %v59, 0.5
    %v61 = vadd.f32 %v60, 0.5
    %s62 = sld [smem:[#allocation4]]
    %s63 = sld [smem:[#allocation4 + $0x3]]
    %v64 = vstv %s62
    %v65 = vstv %s63
    %v66 = vsel %vm43, %v64, %v65
    %v67 = vmul.f32 %v66, %v61
    %v68 = vadd.f32 %v67, 0.0
    %s69 = sld [smem:[#allocation2 + $0x2]]
    %s70 = smul.f32 %s69, 0.5
    %s71 = sld [smem:[#allocation2 + $0x3]]
    %s72 = smul.f32 %s71, 0.5
    %v73 = vstv %s70
    %v74 = vmul.f32 %v73, %v48
    %v75 = vstv %s72
    %v76 = vmul.f32 %v75, %v49
    %v77 = vadd.f32 %v74, %v76
    %v78 = vtanh.pop %v77
    %v79 = vmul.f32 %v78, 0.5
    %v80 = vadd.f32 %v79, 0.5
    %s81 = sld [smem:[#allocation4 + $0x1]]
    %s82 = sld [smem:[#allocation4 + $0x4]]
    %v83 = vstv %s81
    %v84 = vstv %s82
    %v85 = vsel %vm43, %v83, %v84
    %v86 = vmul.f32 %v85, %v80
    %v87 = vadd.f32 %v68, %v86
    %s88 = sld [smem:[#allocation2 + $0x4]]
    %s89 = smul.f32 %s88, 0.5
    %s90 = sld [smem:[#allocation2 + $0x5]]
    %s91 = smul.f32 %s90, 0.5
    %v92 = vstv %s89
    %v93 = vmul.f32 %v92, %v48
    %v94 = vstv %s91
    %v95 = vmul.f32 %v94, %v49
    %v96 = vadd.f32 %v93, %v95
    %v97 = vtanh.pop %v96
    %v98 = vmul.f32 %v97, 0.5
    %v99 = vadd.f32 %v98, 0.5
    %s100 = sld [smem:[#allocation4 + $0x2]]
    %s101 = sld [smem:[#allocation4 + $0x5]]
    %v102 = vstv %s100
    %v103 = vstv %s101
    %v104 = vsel %vm43, %v102, %v103
    %v105 = vmul.f32 %v104, %v99
    %v106 = vadd.f32 %v87, %v105
    %107 = vst [vmem:[%s3] sm:$0x3] %v106
    // Predicated region
    $region22: #{fnn_forward.1} parent=1 // pred_check
      _
    $region23: #{fnn_forward.1} parent=1 // pred_check_branch
      %109 = sbr.rel (0) target = $region25
    $region24: #{fnn_forward.1} parent=1 // pred_region
      _
    $region25: #{fnn_forward.1} parent=1 // pred_fallthru
      _
    // Predicated region
    $region26: #{fnn_forward.1} parent=1 // pred_check
      _
    $region27: #{fnn_forward.1} parent=1 // pred_check_branch
      %111 = sbr.rel (0) target = $region29
    $region28: #{fnn_forward.1} parent=1 // pred_region
      _
    $region29: #{fnn_forward.1} parent=1 // pred_fallthru
      _
    %112 = vsyncpa [#allocation3], 1
    %113 = vsyncpa [#allocation5], 1

</llo_original>
